<compile_context>
chip_gen: v6e
topology: v6e:2x2x1
jax: 0.10.0
libtpu: 0.0.40
codegen_flags: <defaults>
</compile_context>

<pallas_src>
import functools

import jax
import jax.numpy as jnp
from jax.experimental import pallas as pl
from jax.experimental.pallas import tpu as pltpu


def _cnn_kernel(x_ref, w_ref, b_ref, o_ref, *, window, pad, l_out):
    # x_ref: (B, L, W)        unpadded input (channel dim already squeezed)
    # w_ref: (H, window*W)    conv weight flattened over (kh, kw)
    # b_ref: (1, H)           bias
    # o_ref: (B, H, L_out)    NCH output (transpose fused in-kernel)
    B, L, W = x_ref.shape
    x = x_ref[...]                                                 # (B, L, W)

    # Fused zero-padding along the height axis (Conv2d padding=(pad, 0)).
    zrow = jnp.zeros((B, pad, W), x.dtype)
    x_pad = jnp.concatenate([zrow, x, zrow], axis=1)               # (B, L+2p, W)

    # im2col: one lane-axis concat of the shifted windows -> single MXU matmul.
    x_unf = jnp.concatenate(
        [x_pad[:, k:k + l_out, :] for k in range(window)], axis=-1)  # (B, L_out, window*W)
    x2d = x_unf.reshape(B * l_out, window * W)                     # (B*L_out, window*W)

    # Weight arrives as (H, window*W); in-kernel 2-D transpose keeps the
    # wrapper metadata-only and is hidden under the MXU work.
    acc = jnp.dot(x2d, w_ref[...].T,
                  preferred_element_type=jnp.float32)              # (B*L_out, H)
    acc = acc + b_ref[...]                                         # broadcast bias add

    # Fused output transpose: per-batch (L_out, H) -> (H, L_out), stored once
    # per batch (B is tiny; offsets are static, sublane-aligned slices).
    for b in range(B):
        o_ref[b] = acc[b * l_out:(b + 1) * l_out, :].T.astype(o_ref.dtype)


def cnn_forward(embedding, weight, bias, *, window_size, pad=1):
    """embedding: (B, 1, L, W) NCHW; weight: (H, 1, window, W) OIHW; bias: (H,)."""
    B, C, L, W = embedding.shape
    assert C == 1
    H = weight.shape[0]
    L_out = L + 2 * pad - window_size + 1

    # All wrapper-side transforms are metadata-only reshapes (contiguous dims).
    x = embedding.reshape(B, L, W)
    w2 = weight.reshape(H, window_size * W)
    b2 = bias.reshape(1, H)

    kernel = functools.partial(_cnn_kernel, window=window_size, pad=pad, l_out=L_out)

    out = pl.pallas_call(
        kernel,
        out_shape=jax.ShapeDtypeStruct((B, H, L_out), jnp.float32),
        # Single invocation (no grid): each operand is one whole-array VMEM block.
        in_specs=[
            pl.BlockSpec(memory_space=pltpu.MemorySpace.VMEM),
            pl.BlockSpec(memory_space=pltpu.MemorySpace.VMEM),
            pl.BlockSpec(memory_space=pltpu.MemorySpace.VMEM),
        ],
        out_specs=pl.BlockSpec(memory_space=pltpu.MemorySpace.VMEM),
    )(x, w2, b2)

    # Only a metadata reshape remains outside the kernel: (B, H, L_out, 1) NCHW.
    return out[..., None]


if __name__ == "__main__":
    # Small config consistent with the module:
    #   max_length=16, word_size=24, pos_size=4 -> in_width=32,
    #   window_size=3, hidden_size=32, batch=2
    B = 2
    max_length = 16
    word_size, pos_size = 24, 4
    in_width = word_size + 2 * pos_size        # 32
    window_size = 3
    hidden_size = 32

    key = jax.random.PRNGKey(0)
    k_x, k_w, k_b = jax.random.split(key, 3)
    embedding = jax.random.normal(k_x, (B, 1, max_length, in_width), jnp.float32)
    # Conv2d weight shape: (out_channels, in_channels=1, kh=window, kw=in_width)
    weight = jax.random.normal(k_w, (hidden_size, 1, window_size, in_width),
                               jnp.float32) * 0.1
    bias = jax.random.normal(k_b, (hidden_size,), jnp.float32) * 0.1

    out = cnn_forward(embedding, weight, bias, window_size=window_size)
    out = jax.block_until_ready(out)

    # Reference: plain XLA conv with identical semantics (padding=(1,0)).
    ref = jax.lax.conv_general_dilated(
        embedding, weight, window_strides=(1, 1),
        padding=((1, 1), (0, 0)),
        dimension_numbers=("NCHW", "OIHW", "NCHW"))
    ref = ref + bias[None, :, None, None]

    assert out.shape == ref.shape, (out.shape, ref.shape)
    assert jnp.allclose(out, ref, atol=1e-4, rtol=1e-4)
    print("KERNEL_OK")
</pallas_src>

<mosaic_0001>
module attributes {stable_mosaic.version = 11 : i64} {
  func.func @_cnn_kernel(%arg0: memref<2x16x32xf32, #tpu.memory_space<vmem>>, %arg1: memref<32x96xf32, #tpu.memory_space<vmem>>, %arg2: memref<1x32xf32, #tpu.memory_space<vmem>>, %arg3: memref<2x32x16xf32, #tpu.memory_space<vmem>>) attributes {dimension_semantics = [], scalar_prefetch = 0 : i64, scratch_operands = 0 : i64, tpu.core_type = #tpu.core_type<tc>} {
    %c0 = arith.constant 0 : index
    %c0_0 = arith.constant 0 : index
    %c0_1 = arith.constant 0 : index
    %0 = vector.load %arg0[%c0, %c0_0, %c0_1] : memref<2x16x32xf32, #tpu.memory_space<vmem>>, vector<2x16x32xf32>
    %cst = arith.constant 0.000000e+00 : f32
    %1 = vector.broadcast %cst : f32 to vector<2x1x32xf32>
    %2 = tpu.concatenate %1, %0, %1 in 1 : vector<2x1x32xf32>, vector<2x16x32xf32>, vector<2x1x32xf32> -> vector<2x18x32xf32>
    %3 = vector.extract_strided_slice %2 {offsets = [0, 0, 0], sizes = [2, 16, 32], strides = [1, 1, 1]} : vector<2x18x32xf32> to vector<2x16x32xf32>
    %4 = vector.extract_strided_slice %2 {offsets = [0, 1, 0], sizes = [2, 16, 32], strides = [1, 1, 1]} : vector<2x18x32xf32> to vector<2x16x32xf32>
    %5 = vector.extract_strided_slice %2 {offsets = [0, 2, 0], sizes = [2, 16, 32], strides = [1, 1, 1]} : vector<2x18x32xf32> to vector<2x16x32xf32>
    %6 = tpu.concatenate %3, %4, %5 in 2 : vector<2x16x32xf32>, vector<2x16x32xf32>, vector<2x16x32xf32> -> vector<2x16x96xf32>
    %7 = vector.shape_cast %6 : vector<2x16x96xf32> to vector<32x96xf32>
    %c0_2 = arith.constant 0 : index
    %c0_3 = arith.constant 0 : index
    %8 = vector.load %arg1[%c0_2, %c0_3] : memref<32x96xf32, #tpu.memory_space<vmem>>, vector<32x96xf32>
    %9 = tpu.transpose %8, [1, 0] : vector<32x96xf32> -> vector<96x32xf32>
    %cst_4 = arith.constant dense<0.000000e+00> : vector<32x32xf32>
    %10 = tpu.matmul %7, %9, %cst_4 {dimension_numbers = #tpu.dot_dimension_numbers<[1], [0], [0], [1], [0, 0, 1, 1], [], []>} : vector<32x96xf32>, vector<96x32xf32>, vector<32x32xf32> -> vector<32x32xf32>
    %c0_5 = arith.constant 0 : index
    %c0_6 = arith.constant 0 : index
    %11 = vector.load %arg2[%c0_5, %c0_6] : memref<1x32xf32, #tpu.memory_space<vmem>>, vector<1x32xf32>
    %12 = vector.broadcast %11 : vector<1x32xf32> to vector<32x32xf32>
    %13 = arith.addf %10, %12 : vector<32x32xf32>
    %14 = vector.extract_strided_slice %13 {offsets = [0, 0], sizes = [16, 32], strides = [1, 1]} : vector<32x32xf32> to vector<16x32xf32>
    %15 = tpu.transpose %14, [1, 0] : vector<16x32xf32> -> vector<32x16xf32>
    %c0_7 = arith.constant 0 : index
    %c0_8 = arith.constant 0 : index
    %c0_9 = arith.constant 0 : index
    %16 = vector.load %arg3[%c0_7, %c0_8, %c0_9] : memref<2x32x16xf32, #tpu.memory_space<vmem>>, vector<1x32x16xf32>
    %17 = vector.shape_cast %16 : vector<1x32x16xf32> to vector<32x16xf32>
    %18 = vector.shape_cast %15 : vector<32x16xf32> to vector<1x32x16xf32>
    tpu.vector_store %arg3[%c0_7, %c0_8, %c0_9], %18 {strides = array<i32>} : memref<2x32x16xf32, #tpu.memory_space<vmem>>, vector<1x32x16xf32>,
    %19 = vector.extract_strided_slice %13 {offsets = [16, 0], sizes = [16, 32], strides = [1, 1]} : vector<32x32xf32> to vector<16x32xf32>
    %20 = tpu.transpose %19, [1, 0] : vector<16x32xf32> -> vector<32x16xf32>
    %c1 = arith.constant 1 : index
    %c0_10 = arith.constant 0 : index
    %c0_11 = arith.constant 0 : index
    %21 = vector.load %arg3[%c1, %c0_10, %c0_11] : memref<2x32x16xf32, #tpu.memory_space<vmem>>, vector<1x32x16xf32>
    %22 = vector.shape_cast %21 : vector<1x32x16xf32> to vector<32x16xf32>
    %23 = vector.shape_cast %20 : vector<32x16xf32> to vector<1x32x16xf32>
    tpu.vector_store %arg3[%c1, %c0_10, %c0_11], %23 {strides = array<i32>} : memref<2x32x16xf32, #tpu.memory_space<vmem>>, vector<1x32x16xf32>,
    return
  }
}

</mosaic_0001>

<llo_original>
// kernel: tpu_custom_call.1
$region0: #{tpu_custom_call.1}
  #allocation0 [shape = 'u32[]', space=smem, size = 0x4, offset = 0x4, fixed_abs, tag = 'smem constant byte address 0x4 - core index']
  #allocation1 [shape = 'u32[144,128]{1,0:T(1,128)}', space=vmem, size = 0x12000, scoped, tag = 'internal scratch']
  %s0 = inlined_call_operand.hbm [shape: f32[2,16,32], index: 0, kind: input, shape index: {}]
  %s1 = inlined_call_operand.hbm [shape: f32[32,96], index: 1, kind: input, shape index: {}]
  %s2 = inlined_call_operand.vmem [shape: f32[1,32], index: 2, kind: input, shape index: {}]
  %s3 = inlined_call_operand.vmem [shape: f32[2,32,16], index: 3, kind: output, shape index: {}]
  %s4 = sld [smem:[#allocation0]]
  $region30: #{tpu_custom_call.1} parent=0
    _
  %s6 = ssub.s32 1, %s4
  %s7 = scalar_select 0, %s6, %s4
  $region1: #{tpu_custom_call.1} parent=0
    #allocation2 [shape = 'u8[16384]{0}', space=vmem, size = 0x4000, scoped, tag = 'input window, operand 0, single buffered']
    #allocation3 [shape = 's32[1]{0}', space=sflag, size = 0x4, scoped, tag = 'scoped memory for tpu_custom_call.1']
    #allocation4 [shape = 'u8[16384]{0}', space=vmem, size = 0x4000, scoped, tag = 'input window, operand 1, single buffered']
    #allocation5 [shape = 's32[1]{0}', space=sflag, size = 0x4, scoped, tag = 'scoped memory for tpu_custom_call.1']
    %8 = vsyncpa [#allocation3], 0
    %9 = vsyncpa [#allocation5], 0
    // Predicated region
    $region2: #{tpu_custom_call.1} parent=1 // pred_check
      _
    $region3: #{tpu_custom_call.1} parent=1 // pred_check_branch
      %11 = sbr.rel (0) target = $region5
    $region4: #{tpu_custom_call.1} parent=1 // pred_region
      %s13 = ssub.s32 512, 512
      %14 = vsyncadd [#allocation3], %s13
      %s15 = sshll.u32 [#allocation2], 4
      %s16 = int_to_ptr.vmem [resolvable:$true] %s15
      %21 = dma.hbm_to_vmem [thread:$0]  %s0, 512, %s16, [#allocation3], 128, 128, 8
    $region5: #{tpu_custom_call.1} parent=1 // pred_fallthru
      _
    // Predicated region
    $region6: #{tpu_custom_call.1} parent=1 // pred_check
      _
    $region7: #{tpu_custom_call.1} parent=1 // pred_check_branch
      %23 = sbr.rel (0) target = $region9
    $region8: #{tpu_custom_call.1} parent=1 // pred_region
      %s25 = ssub.s32 512, 512
      %26 = vsyncadd [#allocation5], %s25
      %s27 = sshll.u32 [#allocation4], 4
      %s28 = int_to_ptr.vmem [resolvable:$true] %s27
      %33 = dma.hbm_to_vmem [thread:$0]  %s1, 512, %s28, [#allocation5], 128, 128, 8
    $region9: #{tpu_custom_call.1} parent=1 // pred_fallthru
      _
    // Predicated region
    $region10: #{tpu_custom_call.1} parent=1 // pred_check
      _
    $region11: #{tpu_custom_call.1} parent=1 // pred_check_branch
      %35 = sbr.rel (0) target = $region13
    $region12: #{tpu_custom_call.1} parent=1 // pred_region
      _
    $region13: #{tpu_custom_call.1} parent=1 // pred_fallthru
      _
    // Predicated region
    $region14: #{tpu_custom_call.1} parent=1 // pred_check
      _
    $region15: #{tpu_custom_call.1} parent=1 // pred_check_branch
      %37 = sbr.rel (0) target = $region17
    $region16: #{tpu_custom_call.1} parent=1 // pred_region
      %38 = dma.done [#allocation3], 512
    $region17: #{tpu_custom_call.1} parent=1 // pred_fallthru
      _
    // Predicated region
    $region18: #{tpu_custom_call.1} parent=1 // pred_check
      _
    $region19: #{tpu_custom_call.1} parent=1 // pred_check_branch
      %40 = sbr.rel (0) target = $region21
    $region20: #{tpu_custom_call.1} parent=1 // pred_region
      %41 = dma.done [#allocation5], 512
    $region21: #{tpu_custom_call.1} parent=1 // pred_fallthru
      _
    %v42 = vld [vmem:[#allocation2] sm:$0xff]
    %v43 = vld [vmem:[#allocation2 + $0x8] sm:$0xff]
    %v44 = vld [vmem:[#allocation2 + $0x10] sm:$0xff]
    %v45 = vld [vmem:[#allocation2 + $0x18] sm:$0xff]
    %vm50 = vcmask 1040384
    %v51 = vrot.slane %v42, 7
    %v52 = vrot.slane %v43, 7
    %v53 = vsel %vm50, %v51, %v52
    %v54 = vrot.slane %v44, 7
    %v55 = vrot.slane %v45, 7
    %v56 = vsel %vm50, %v54, %v55
    %v63 = vsel %vm50, 0.0, %v51
    %v64 = vsel %vm50, 0.0, %v54
    %v65 = vsel %vm50, %v52, 0.0
    %v66 = vsel %vm50, %v55, 0.0
    %vm71 = vcmask 1046528
    %v72 = vrot.slane %v63, 1
    %v73 = vrot.slane %v53, 1
    %v74 = vsel %vm71, %v72, %v73
    %v75 = vrot.slane %v65, 1
    %v76 = vsel %vm71, %v73, %v75
    %v77 = vrot.slane %v64, 1
    %v78 = vrot.slane %v56, 1
    %v79 = vsel %vm71, %v77, %v78
    %v80 = vrot.slane %v66, 1
    %v81 = vsel %vm71, %v78, %v80
    %82 = vrot.lane.b32.xlu0 %v74, 32
    %v83 = vpop.permute.xlu0 %82
    %84 = vrot.lane.b32.xlu0 %v76, 32
    %v85 = vpop.permute.xlu0 %84
    %86 = vrot.lane.b32.xlu0 %v79, 32
    %v87 = vpop.permute.xlu0 %86
    %88 = vrot.lane.b32.xlu0 %v81, 32
    %v89 = vpop.permute.xlu0 %88
    %vm94 = vcmask 1045504
    %v95 = vrot.slane %v63, 2
    %v96 = vrot.slane %v53, 2
    %v97 = vsel %vm94, %v95, %v96
    %v98 = vrot.slane %v65, 2
    %v99 = vsel %vm94, %v96, %v98
    %v100 = vrot.slane %v64, 2
    %v101 = vrot.slane %v56, 2
    %v102 = vsel %vm94, %v100, %v101
    %v103 = vrot.slane %v66, 2
    %v104 = vsel %vm94, %v101, %v103
    %105 = vrot.lane.b32.xlu0 %v97, 64
    %v106 = vpop.permute.xlu0 %105
    %107 = vrot.lane.b32.xlu0 %v99, 64
    %v108 = vpop.permute.xlu0 %107
    %109 = vrot.lane.b32.xlu0 %v102, 64
    %v110 = vpop.permute.xlu0 %109
    %111 = vrot.lane.b32.xlu0 %v104, 64
    %v112 = vpop.permute.xlu0 %111
    %vm117 = vcmask 261120
    %v118 = vsel %vm117, %v63, %v83
    %v119 = vsel %vm117, %v53, %v85
    %v120 = vsel %vm117, %v64, %v87
    %v121 = vsel %vm117, %v56, %v89
    %vm122 = vcmask 523264
    %v123 = vsel %vm122, %v118, %v106
    %v124 = vsel %vm122, %v119, %v108
    %v125 = vsel %vm122, %v120, %v110
    %v126 = vsel %vm122, %v121, %v112
    %v127 = vld [vmem:[#allocation4] sm:$0xff]
    %v128 = vld [vmem:[#allocation4 + $0x8] sm:$0xff]
    %v129 = vld [vmem:[#allocation4 + $0x10] sm:$0xff]
    %v130 = vld [vmem:[#allocation4 + $0x18] sm:$0xff]
    %v131 = vld [vmem:[%s2] sm:$0x1]
    %v133 = vlaneseq
    %v134 = vshrl.u32 %v133, 7
    %v135 = vsub.s32 0, %v134
    %v136 = vrot.slane %v131, %v135
    %vm138 = vcmask 785408
    %v140 = vsel %vm138, %v123, 0
    %v143 = vsel %vm138, %v124, 0
    %v146 = vsel %vm138, %v125, 0
    %v149 = vsel %vm138, %v126, 0
    %v152 = vsel %vm138, %v127, 0
    %v155 = vsel %vm138, %v128, 0
    %v158 = vsel %vm138, %v129, 0
    %v161 = vsel %vm138, %v130, 0
    %163 = vmatprep.subr.mxu0 0.0
    %164 = vmatpush1.xpose.msra.mxu0 0.0
    %165 = vmatprep.subr.mxu0 0.0
    %166 = vmatpush1.xpose.msra.mxu0 0.0
    %167 = vmatprep.subr.mxu0 0.0
    %168 = vmatpush1.xpose.msra.mxu0 0.0
    %169 = vmatprep.subr.mxu0 0.0
    %170 = vmatpush1.xpose.msra.mxu0 0.0
    %171 = vmatprep.subr.mxu0 0.0
    %172 = vmatpush1.xpose.msra.mxu0 0.0
    %173 = vmatprep.subr.mxu0 0.0
    %174 = vmatpush1.xpose.msra.mxu0 0.0
    %175 = vmatprep.subr.mxu0 0.0
    %176 = vmatpush1.xpose.msra.mxu0 0.0
    %177 = vmatprep.subr.mxu0 0.0
    %178 = vmatpush1.xpose.msra.mxu0 0.0
    %179 = vmatprep.subr.mxu0 0.0
    %180 = vmatpush1.xpose.msra.mxu0 0.0
    %181 = vmatprep.subr.mxu0 0.0
    %182 = vmatpush1.xpose.msra.mxu0 0.0
    %183 = vmatprep.subr.mxu0 0.0
    %184 = vmatpush1.xpose.msra.mxu0 0.0
    %185 = vmatprep.subr.mxu0 0.0
    %186 = vmatpush1.xpose.msra.mxu0 0.0
    %187 = vmatprep.subr.mxu0 0.0
    %188 = vmatpush1.xpose.msra.mxu0 %v161
    %189 = vmatprep.subr.mxu0 0.0
    %190 = vmatpush1.xpose.msra.mxu0 %v158
    %191 = vmatprep.subr.mxu0 0.0
    %192 = vmatpush1.xpose.msra.mxu0 %v155
    %193 = vmatprep.subr.mxu0 0.0
    %194 = vmatpush1.xpose.msra.mxu0 %v152
    %195 = vmatprep.subr.mxu0 0.0
    %196 = vmatpush2.xpose.msra.mxu0 0.0
    %197 = vmatprep.subr.mxu0 0.0
    %198 = vmatpush2.xpose.msra.mxu0 0.0
    %199 = vmatprep.subr.mxu0 0.0
    %200 = vmatpush2.xpose.msra.mxu0 0.0
    %201 = vmatprep.subr.mxu0 0.0
    %202 = vmatpush2.xpose.msra.mxu0 0.0
    %203 = vmatprep.subr.mxu0 0.0
    %204 = vmatpush2.xpose.msra.mxu0 0.0
    %205 = vmatprep.subr.mxu0 0.0
    %206 = vmatpush2.xpose.msra.mxu0 0.0
    %207 = vmatprep.subr.mxu0 0.0
    %208 = vmatpush2.xpose.msra.mxu0 0.0
    %209 = vmatprep.subr.mxu0 0.0
    %210 = vmatpush2.xpose.msra.mxu0 0.0
    %211 = vmatprep.subr.mxu0 0.0
    %212 = vmatpush2.xpose.msra.mxu0 0.0
    %213 = vmatprep.subr.mxu0 0.0
    %214 = vmatpush2.xpose.msra.mxu0 0.0
    %215 = vmatprep.subr.mxu0 0.0
    %216 = vmatpush2.xpose.msra.mxu0 0.0
    %217 = vmatprep.subr.mxu0 0.0
    %218 = vmatpush2.xpose.msra.mxu0 0.0
    %219 = vmatprep.subr.mxu0 0.0
    %220 = vmatpush2.xpose.msra.mxu0 0.0
    %221 = vmatprep.subr.mxu0 0.0
    %222 = vmatpush2.xpose.msra.mxu0 0.0
    %223 = vmatprep.subr.mxu0 0.0
    %224 = vmatpush2.xpose.msra.mxu0 0.0
    %225 = vmatprep.subr.mxu0 0.0
    %226 = vmatpush2.xpose.msra.mxu0 0.0
    %227 = vmatprep.mubr.f32.mxu0 0.0
    %228 = vmatmul.mubr.f32.gmra.mxu0 %v140
    %v229 = vpop.f32.mrf.mxu0
    %v230 = vadd.f32 %v136, %v229
    %v231 = vpop.f32.mrf.mxu0
    %232 = vmatprep.mubr.f32.mxu0 0.0
    %233 = vmatmul.mubr.f32.gmra.mxu0 %v143
    %v234 = vpop.f32.mrf.mxu0
    %v235 = vadd.f32 %v136, %v234
    %v236 = vpop.f32.mrf.mxu0
    %237 = vmatprep.mubr.f32.mxu0 0.0
    %238 = vmatmul.mubr.f32.gmra.mxu0 %v146
    %v239 = vpop.f32.mrf.mxu0
    %v240 = vadd.f32 %v136, %v239
    %v241 = vpop.f32.mrf.mxu0
    %242 = vmatprep.mubr.f32.mxu0 0.0
    %243 = vmatmul.mubr.f32.gmra.mxu0 %v149
    %v244 = vpop.f32.mrf.mxu0
    %v245 = vadd.f32 %v136, %v244
    %v246 = vpop.f32.mrf.mxu0
    %247 = vdwg.mxu0
    %248 = vxpose.xlu0.b32.start [1/16] %v230, 128
    %249 = vxpose.xlu0.b32.cont [2/16] %v235, 128
    %250 = vxpose.xlu0.b32.cont [3/16] 0.0, 128
    %251 = vxpose.xlu0.b32.cont [4/16] 0.0, 128
    %252 = vxpose.xlu0.b32.cont [5/16] 0.0, 128
    %253 = vxpose.xlu0.b32.cont [6/16] 0.0, 128
    %254 = vxpose.xlu0.b32.cont [7/16] 0.0, 128
    %255 = vxpose.xlu0.b32.cont [8/16] 0.0, 128
    %256 = vxpose.xlu0.b32.cont [9/16] 0.0, 128
    %257 = vxpose.xlu0.b32.cont [10/16] 0.0, 128
    %258 = vxpose.xlu0.b32.cont [11/16] 0.0, 128
    %259 = vxpose.xlu0.b32.cont [12/16] 0.0, 128
    %260 = vxpose.xlu0.b32.cont [13/16] 0.0, 128
    %261 = vxpose.xlu0.b32.cont [14/16] 0.0, 128
    %262 = vxpose.xlu0.b32.cont [15/16] 0.0, 128
    %263 = vxpose.xlu0.b32.end [16/16] 0.0, 128
    %v264 = vpop.trf.xlu0
    %v265 = vpop.trf.xlu0
    %v266 = vpop.trf.xlu0
    %v267 = vpop.trf.xlu0
    %v268 = vpop.trf.xlu0
    %v269 = vpop.trf.xlu0
    %v270 = vpop.trf.xlu0
    %v271 = vpop.trf.xlu0
    %v272 = vpop.trf.xlu0
    %v273 = vpop.trf.xlu0
    %v274 = vpop.trf.xlu0
    %v275 = vpop.trf.xlu0
    %v276 = vpop.trf.xlu0
    %v277 = vpop.trf.xlu0
    %v278 = vpop.trf.xlu0
    %v279 = vpop.trf.xlu0
    %vm280 = vcmask 130048
    %281 = vst.msk [vmem:[%s3] sm:$0xff] %vm280, %v264
    %282 = vst.msk [vmem:[%s3 + $0x8] sm:$0xff] %vm280, %v265
    %283 = vst.msk [vmem:[%s3 + $0x10] sm:$0xff] %vm280, %v266
    %284 = vst.msk [vmem:[%s3 + $0x18] sm:$0xff] %vm280, %v267
    %285 = vxpose.xlu0.b32.start [1/16] %v240, 128
    %286 = vxpose.xlu0.b32.cont [2/16] %v245, 128
    %287 = vxpose.xlu0.b32.cont [3/16] 0.0, 128
    %288 = vxpose.xlu0.b32.cont [4/16] 0.0, 128
    %289 = vxpose.xlu0.b32.cont [5/16] 0.0, 128
    %290 = vxpose.xlu0.b32.cont [6/16] 0.0, 128
    %291 = vxpose.xlu0.b32.cont [7/16] 0.0, 128
    %292 = vxpose.xlu0.b32.cont [8/16] 0.0, 128
    %293 = vxpose.xlu0.b32.cont [9/16] 0.0, 128
    %294 = vxpose.xlu0.b32.cont [10/16] 0.0, 128
    %295 = vxpose.xlu0.b32.cont [11/16] 0.0, 128
    %296 = vxpose.xlu0.b32.cont [12/16] 0.0, 128
    %297 = vxpose.xlu0.b32.cont [13/16] 0.0, 128
    %298 = vxpose.xlu0.b32.cont [14/16] 0.0, 128
    %299 = vxpose.xlu0.b32.cont [15/16] 0.0, 128
    %300 = vxpose.xlu0.b32.end [16/16] 0.0, 128
    %v301 = vpop.trf.xlu0
    %v302 = vpop.trf.xlu0
    %v303 = vpop.trf.xlu0
    %v304 = vpop.trf.xlu0
    %v305 = vpop.trf.xlu0
    %v306 = vpop.trf.xlu0
    %v307 = vpop.trf.xlu0
    %v308 = vpop.trf.xlu0
    %v309 = vpop.trf.xlu0
    %v310 = vpop.trf.xlu0
    %v311 = vpop.trf.xlu0
    %v312 = vpop.trf.xlu0
    %v313 = vpop.trf.xlu0
    %v314 = vpop.trf.xlu0
    %v315 = vpop.trf.xlu0
    %v316 = vpop.trf.xlu0
    %s317 = scalar_lea.vmem %s3, 32
    %318 = vst.msk [vmem:[%s317] sm:$0xff] %vm280, %v301
    %319 = vst.msk [vmem:[%s317 + $0x8] sm:$0xff] %vm280, %v302
    %320 = vst.msk [vmem:[%s317 + $0x10] sm:$0xff] %vm280, %v303
    %321 = vst.msk [vmem:[%s317 + $0x18] sm:$0xff] %vm280, %v304
    // Predicated region
    $region22: #{tpu_custom_call.1} parent=1 // pred_check
      _
    $region23: #{tpu_custom_call.1} parent=1 // pred_check_branch
      %323 = sbr.rel (0) target = $region25
    $region24: #{tpu_custom_call.1} parent=1 // pred_region
      _
    $region25: #{tpu_custom_call.1} parent=1 // pred_fallthru
      _
    // Predicated region
    $region26: #{tpu_custom_call.1} parent=1 // pred_check
      _
    $region27: #{tpu_custom_call.1} parent=1 // pred_check_branch
      %325 = sbr.rel (0) target = $region29
    $region28: #{tpu_custom_call.1} parent=1 // pred_region
      _
    $region29: #{tpu_custom_call.1} parent=1 // pred_fallthru
      _
    %326 = vsyncpa [#allocation3], 1
    %327 = vsyncpa [#allocation5], 1

</llo_original>
